<compile_context>
chip_gen: v7x
topology: tpu7x:2x2x1
jax: 0.10.0
libtpu: 0.0.40
codegen_flags: <defaults>
</compile_context>

<pallas_src>
import jax
import jax.numpy as jnp
from jax import lax
from jax.experimental import pallas as pl
from jax.experimental.pallas import tpu as pltpu

_MB = 1024 * 1024


def _doc2vec_kernel(comb_ref, w_ref, b_ref, out_ref, m_ref, l_ref):
    # comb_ref: [tB, E]  bf16 combined (word + doc) embeddings, resident over j
    # w_ref   : [tV, E]  bf16 linear weight tile (PyTorch layout, contract E)
    # b_ref   : [1, tV]  f32 bias tile
    # out_ref : [tB, V]  output row-slab, VMEM resident across the V grid axis
    # m_ref   : [tB, 1]  f32 running row max      (scratch)
    # l_ref   : [tB, 1]  f32 running row sum-exp  (scratch)
    j = pl.program_id(1)
    num_v = pl.num_programs(1)
    t_v = w_ref.shape[0]

    @pl.when(j == 0)
    def _init():
        m_ref[...] = jnp.full(m_ref.shape, -jnp.inf, jnp.float32)
        l_ref[...] = jnp.zeros(l_ref.shape, jnp.float32)

    # [tB, E] x [tV, E]^T -> [tB, tV], f32 accumulation on the MXU.
    logits = lax.dot_general(
        comb_ref[...], w_ref[...],
        dimension_numbers=(((1,), (1,)), ((), ())),
        preferred_element_type=jnp.float32)
    logits = logits + b_ref[...]                               # broadcast bias

    # Online (max-shifted) logsumexp across V tiles — exact, not per-tile.
    tile_max = jnp.max(logits, axis=1, keepdims=True)          # [tB, 1]
    m_new = jnp.maximum(m_ref[...], tile_max)
    l_ref[...] = (l_ref[...] * jnp.exp(m_ref[...] - m_new) +
                  jnp.sum(jnp.exp(logits - m_new), axis=1, keepdims=True))
    m_ref[...] = m_new

    # Stage raw logits into the resident output row-slab.
    col = j * t_v
    if t_v % 128 == 0:              # static: only hint alignment when true
        col = pl.multiple_of(col, 128)
    out_ref[:, pl.ds(col, t_v)] = logits.astype(out_ref.dtype)

    # Last V tile: normalize the whole row in-place.
    @pl.when(j == num_v - 1)
    def _finalize():
        lse = m_ref[...] + jnp.log(l_ref[...])                 # [tB, 1]
        out_ref[...] = (out_ref[...].astype(jnp.float32) - lse).astype(
            out_ref.dtype)


def _vmem_limit_bytes():
    """Per-generation VMEM limit with headroom (v7x 64 MiB, v5e/v6e 128 MiB)."""
    try:
        cap = int(pltpu.get_tpu_info().vmem_capacity_bytes)
        return int(min(cap - 12 * _MB, 116 * _MB))
    except Exception:
        return 48 * _MB  # safe on every generation


def _largest_divisor(n, upper, multiple):
    """Largest d with n % d == 0, d <= upper, d % multiple == 0 (or None)."""
    d = (min(upper, n) // multiple) * multiple
    while d >= multiple:
        if n % d == 0:
            return d
        d -= multiple
    return None


def _pick_tiles(B, V, E, block_b, block_v, vmem_limit, out_bytes):
    # V tile: largest multiple of 128 dividing V, capped at block_v.
    t_v = _largest_divisor(V, min(block_v, V), 128)
    if t_v is None:
        t_v = V
    # B tile: fit the resident (t_b, V) output slab (double-buffered) plus the
    # double-buffered weight/bias/input streams inside the VMEM budget.
    fixed = 2 * t_v * E * 2 + 2 * max(t_v, 128) * 4
    per_row = 2 * V * out_bytes + 2 * E * 2 + 16
    cap_rows = max(int((vmem_limit * 0.9 - fixed) // per_row), 1)
    upper = min(block_b, B, cap_rows)
    t_b = _largest_divisor(B, upper, 16)
    if t_b is None:
        if B <= upper:
            t_b = B
        else:
            t_b = max(d for d in range(1, upper + 1) if B % d == 0)
    # Megacore (v7x): prefer >= 2 B tiles when that keeps a 16-row multiple.
    if B // t_b == 1:
        half = _largest_divisor(B, B // 2, 16)
        if half is not None:
            t_b = half
    return t_b, t_v


def doc2vec_forward(doc_ids, context_words, word_emb, doc_emb, lin_w, lin_b,
                    *, block_b=128, block_v=1024, out_dtype=jnp.float32):
    """Mirrors Doc2VecModel.forward.

    doc_ids:        [B] int32
    context_words:  [B] int32
    word_emb:       [vocab_size, embed_size]
    doc_emb:        [num_docs, embed_size]
    lin_w:          [vocab_size, embed_size]  (PyTorch nn.Linear weight;
                                               may already be bf16-cached)
    lin_b:          [vocab_size]
    returns:        [B, vocab_size] log-probs (out_dtype, default f32)
    """
    B = doc_ids.shape[0]
    V, E = lin_w.shape

    vmem_limit = _vmem_limit_bytes()
    t_b, t_v = _pick_tiles(B, V, E, block_b, block_v, vmem_limit,
                           jnp.dtype(out_dtype).itemsize)
    assert B % t_b == 0 and V % t_v == 0
    assert t_v == V or t_v % 128 == 0

    # Embedding gathers + the word+doc add are hoisted out of the V loop: a
    # single [B, E] bf16 stream feeds the kernel (add done once, not per tile).
    # TODO(synk): fuse the gathers into the kernel via scalar prefetch +
    # pl.Element row index_maps if they ever show up in profiles.
    word_embeds = jnp.take(word_emb, context_words, axis=0).astype(jnp.float32)
    doc_embeds = jnp.take(doc_emb, doc_ids, axis=0).astype(jnp.float32)
    combined = (word_embeds + doc_embeds).astype(jnp.bfloat16)

    # Only cast the weight if the caller did not already cache a bf16 copy
    # (avoids an extra full HBM pass over [V, E] every call).
    w_bf16 = lin_w if lin_w.dtype == jnp.bfloat16 else lin_w.astype(jnp.bfloat16)
    b2 = lin_b.reshape(1, V).astype(jnp.float32)

    grid = (B // t_b, V // t_v)

    out = pl.pallas_call(
        _doc2vec_kernel,
        out_shape=jax.ShapeDtypeStruct((B, V), out_dtype),
        grid_spec=pltpu.PrefetchScalarGridSpec(
            num_scalar_prefetch=0,
            grid=grid,
            in_specs=[
                pl.BlockSpec((t_b, E), lambda i, j: (i, 0)),    # combined embeds
                pl.BlockSpec((t_v, E), lambda i, j: (j, 0)),    # weight tile
                pl.BlockSpec((1, t_v), lambda i, j: (0, j)),    # bias tile
            ],
            # Output row-slab stays resident across the (arbitrary) V axis.
            out_specs=pl.BlockSpec((t_b, V), lambda i, j: (i, 0)),
            scratch_shapes=[
                pltpu.VMEM((t_b, 1), jnp.float32),              # running max
                pltpu.VMEM((t_b, 1), jnp.float32),              # running sumexp
            ],
        ),
        compiler_params=pltpu.CompilerParams(
            dimension_semantics=("parallel", "arbitrary"),
            vmem_limit_bytes=int(vmem_limit),
        ),
    )(combined, w_bf16, b2)
    return out


def _reference(doc_ids, context_words, word_emb, doc_emb, lin_w, lin_b):
    # Mirrors the kernel's math (same bf16 casts, f32 accumulation).
    we = jnp.take(word_emb, context_words, axis=0).astype(jnp.float32)
    de = jnp.take(doc_emb, doc_ids, axis=0).astype(jnp.float32)
    combined = (we + de).astype(jnp.bfloat16)
    logits = lax.dot_general(
        combined, lin_w.astype(jnp.bfloat16),
        dimension_numbers=(((1,), (1,)), ((), ())),
        preferred_element_type=jnp.float32) + lin_b.astype(jnp.float32)
    return jax.nn.log_softmax(logits, axis=1)


if __name__ == "__main__":
    # Small, module-consistent shapes (aligned to TPU tiling); vocab is two V
    # tiles so the streamed online-logsumexp path is exercised.
    vocab_size = 2048
    embed_size = 128
    num_docs = 16
    batch = 32

    key = jax.random.PRNGKey(0)
    k_we, k_de, k_w, k_b, k_ids, k_ctx = jax.random.split(key, 6)

    # Deterministic parameter init (synthetic; roughly matches torch defaults).
    word_emb = jax.random.normal(k_we, (vocab_size, embed_size), jnp.float32)
    doc_emb = jax.random.normal(k_de, (num_docs, embed_size), jnp.float32)
    bound = 1.0 / (embed_size ** 0.5)
    lin_w = jax.random.uniform(k_w, (vocab_size, embed_size), jnp.float32,
                               -bound, bound)
    lin_b = jax.random.uniform(k_b, (vocab_size,), jnp.float32, -bound, bound)

    doc_ids = jax.random.randint(k_ids, (batch,), 0, num_docs, jnp.int32)
    context_words = jax.random.randint(k_ctx, (batch,), 0, vocab_size,
                                       jnp.int32)

    # Cache the bf16 weight once outside the hot path (per perf review).
    lin_w_bf16 = lin_w.astype(jnp.bfloat16)

    out = doc2vec_forward(doc_ids, context_words, word_emb, doc_emb,
                          lin_w_bf16, lin_b)
    out = jax.block_until_ready(out)

    ref = _reference(doc_ids, context_words, word_emb, doc_emb, lin_w, lin_b)
    assert out.shape == (batch, vocab_size)
    assert bool(jnp.all(jnp.isfinite(out))), "non-finite output"
    assert jnp.allclose(out, ref, atol=2e-3, rtol=2e-3), "mismatch vs reference"

    print("KERNEL_OK")
</pallas_src>

<mosaic_0001>
module attributes {stable_mosaic.version = 11 : i64} {
  func.func @_doc2vec_kernel(%arg0: i32, %arg1: i32, %arg2: memref<16x128xbf16, #tpu.memory_space<vmem>>, %arg3: memref<1024x128xbf16, #tpu.memory_space<vmem>>, %arg4: memref<1x1024xf32, #tpu.memory_space<vmem>>, %arg5: memref<16x2048xf32, #tpu.memory_space<vmem>>, %arg6: memref<16x1xf32, #tpu.memory_space<vmem>>, %arg7: memref<16x1xf32, #tpu.memory_space<vmem>>) attributes {dimension_semantics = [#tpu.dimension_semantics<parallel>, #tpu.dimension_semantics<arbitrary>], iteration_bounds = array<i64: 2, 2>, scalar_prefetch = 0 : i64, scratch_operands = 2 : i64, tpu.core_type = #tpu.core_type<tc>, window_params = [{transform_indices = @transform_0, window_bounds = array<i64: 16, 128>}, {transform_indices = @transform_1, window_bounds = array<i64: 1024, 128>}, {transform_indices = @transform_2, window_bounds = array<i64: 1, 1024>}, {transform_indices = @transform_3, window_bounds = array<i64: 16, 2048>}]} {
    %c0_i32 = arith.constant 0 : i32
    %0 = arith.cmpi eq, %arg1, %c0_i32 : i32
    %1 = arith.extui %0 : i1 to i32
    %c0_i32_0 = arith.constant 0 : i32
    %2 = arith.cmpi ne, %1, %c0_i32_0 : i32
    scf.if %2 {
      %cst_20 = arith.constant 0xFF800000 : f32
      %33 = vector.broadcast %cst_20 : f32 to vector<16x1xf32>
      %c0_21 = arith.constant 0 : index
      %c0_22 = arith.constant 0 : index
      %34 = vector.load %arg6[%c0_21, %c0_22] : memref<16x1xf32, #tpu.memory_space<vmem>>, vector<16x1xf32>
      tpu.vector_store %arg6[%c0_21, %c0_22], %33 {strides = array<i32>} : memref<16x1xf32, #tpu.memory_space<vmem>>, vector<16x1xf32>,
      %cst_23 = arith.constant 0.000000e+00 : f32
      %35 = vector.broadcast %cst_23 : f32 to vector<16x1xf32>
      %c0_24 = arith.constant 0 : index
      %c0_25 = arith.constant 0 : index
      %36 = vector.load %arg7[%c0_24, %c0_25] : memref<16x1xf32, #tpu.memory_space<vmem>>, vector<16x1xf32>
      tpu.vector_store %arg7[%c0_24, %c0_25], %35 {strides = array<i32>} : memref<16x1xf32, #tpu.memory_space<vmem>>, vector<16x1xf32>,
    } else {
    }
    %c0 = arith.constant 0 : index
    %c0_1 = arith.constant 0 : index
    %3 = vector.load %arg2[%c0, %c0_1] : memref<16x128xbf16, #tpu.memory_space<vmem>>, vector<16x128xbf16>
    %c0_2 = arith.constant 0 : index
    %c0_3 = arith.constant 0 : index
    %4 = vector.load %arg3[%c0_2, %c0_3] : memref<1024x128xbf16, #tpu.memory_space<vmem>>, vector<1024x128xbf16>
    %cst = arith.constant dense<0.000000e+00> : vector<16x1024xf32>
    %5 = tpu.matmul %3, %4, %cst {dimension_numbers = #tpu.dot_dimension_numbers<[1], [1], [0], [0], [0, 0, 1, 0], [], []>} : vector<16x128xbf16>, vector<1024x128xbf16>, vector<16x1024xf32> -> vector<16x1024xf32>
    %c0_4 = arith.constant 0 : index
    %c0_5 = arith.constant 0 : index
    %6 = vector.load %arg4[%c0_4, %c0_5] : memref<1x1024xf32, #tpu.memory_space<vmem>>, vector<1x1024xf32>
    %7 = vector.broadcast %6 : vector<1x1024xf32> to vector<16x1024xf32>
    %8 = arith.addf %5, %7 : vector<16x1024xf32>
    %cst_6 = arith.constant dense<0xFF800000> : vector<16xf32>
    %9 = vector.multi_reduction <maximumf>, %8, %cst_6 [1] : vector<16x1024xf32> to vector<16xf32>
    %10 = vector.shape_cast %9 : vector<16xf32> to vector<16x1xf32>
    %c0_7 = arith.constant 0 : index
    %c0_8 = arith.constant 0 : index
    %11 = vector.load %arg6[%c0_7, %c0_8] : memref<16x1xf32, #tpu.memory_space<vmem>>, vector<16x1xf32>
    %12 = arith.maximumf %11, %10 : vector<16x1xf32>
    %c0_9 = arith.constant 0 : index
    %c0_10 = arith.constant 0 : index
    %13 = vector.load %arg7[%c0_9, %c0_10] : memref<16x1xf32, #tpu.memory_space<vmem>>, vector<16x1xf32>
    %c0_11 = arith.constant 0 : index
    %c0_12 = arith.constant 0 : index
    %14 = vector.load %arg6[%c0_11, %c0_12] : memref<16x1xf32, #tpu.memory_space<vmem>>, vector<16x1xf32>
    %15 = arith.subf %14, %12 : vector<16x1xf32>
    %16 = math.exp %15 : vector<16x1xf32>
    %17 = arith.mulf %13, %16 : vector<16x1xf32>
    %18 = vector.broadcast %12 : vector<16x1xf32> to vector<16x1024xf32>
    %19 = arith.subf %8, %18 : vector<16x1024xf32>
    %20 = math.exp %19 : vector<16x1024xf32>
    %cst_13 = arith.constant dense<0.000000e+00> : vector<16xf32>
    %21 = vector.multi_reduction <add>, %20, %cst_13 [1] : vector<16x1024xf32> to vector<16xf32>
    %22 = vector.shape_cast %21 : vector<16xf32> to vector<16x1xf32>
    %23 = arith.addf %17, %22 : vector<16x1xf32>
    %c0_14 = arith.constant 0 : index
    %c0_15 = arith.constant 0 : index
    %24 = vector.load %arg7[%c0_14, %c0_15] : memref<16x1xf32, #tpu.memory_space<vmem>>, vector<16x1xf32>
    tpu.vector_store %arg7[%c0_14, %c0_15], %23 {strides = array<i32>} : memref<16x1xf32, #tpu.memory_space<vmem>>, vector<16x1xf32>,
    %c0_16 = arith.constant 0 : index
    %c0_17 = arith.constant 0 : index
    %25 = vector.load %arg6[%c0_16, %c0_17] : memref<16x1xf32, #tpu.memory_space<vmem>>, vector<16x1xf32>
    tpu.vector_store %arg6[%c0_16, %c0_17], %12 {strides = array<i32>} : memref<16x1xf32, #tpu.memory_space<vmem>>, vector<16x1xf32>,
    %c1024_i32 = arith.constant 1024 : i32
    %26 = arith.muli %arg1, %c1024_i32 : i32
    %27 = tpu.assume_multiple %26, 128 : i32
    %c0_18 = arith.constant 0 : index
    %28 = arith.index_cast %27 : i32 to index
    %29 = vector.load %arg5[%c0_18, %28] : memref<16x2048xf32, #tpu.memory_space<vmem>>, vector<16x1024xf32>
    tpu.vector_store %arg5[%c0_18, %28], %8 {strides = array<i32>} : memref<16x2048xf32, #tpu.memory_space<vmem>>, vector<16x1024xf32>,
    %c1_i32 = arith.constant 1 : i32
    %30 = arith.cmpi eq, %arg1, %c1_i32 : i32
    %31 = arith.extui %30 : i1 to i32
    %c0_i32_19 = arith.constant 0 : i32
    %32 = arith.cmpi ne, %31, %c0_i32_19 : i32
    scf.if %32 {
      %c0_20 = arith.constant 0 : index
      %c0_21 = arith.constant 0 : index
      %33 = vector.load %arg6[%c0_20, %c0_21] : memref<16x1xf32, #tpu.memory_space<vmem>>, vector<16x1xf32>
      %c0_22 = arith.constant 0 : index
      %c0_23 = arith.constant 0 : index
      %34 = vector.load %arg7[%c0_22, %c0_23] : memref<16x1xf32, #tpu.memory_space<vmem>>, vector<16x1xf32>
      %35 = math.log %34 : vector<16x1xf32>
      %36 = arith.addf %33, %35 : vector<16x1xf32>
      %c0_24 = arith.constant 0 : index
      %c0_25 = arith.constant 0 : index
      %37 = vector.load %arg5[%c0_24, %c0_25] : memref<16x2048xf32, #tpu.memory_space<vmem>>, vector<16x2048xf32>
      %38 = vector.broadcast %36 : vector<16x1xf32> to vector<16x2048xf32>
      %39 = arith.subf %37, %38 : vector<16x2048xf32>
      %c0_26 = arith.constant 0 : index
      %c0_27 = arith.constant 0 : index
      %40 = vector.load %arg5[%c0_26, %c0_27] : memref<16x2048xf32, #tpu.memory_space<vmem>>, vector<16x2048xf32>
      tpu.vector_store %arg5[%c0_26, %c0_27], %39 {strides = array<i32>} : memref<16x2048xf32, #tpu.memory_space<vmem>>, vector<16x2048xf32>,
    } else {
    }
    return
  }
  func.func @transform_0(%arg0: i32, %arg1: i32) -> (i32, i32) {
    %c0_i32 = arith.constant 0 : i32
    %c0_i32_0 = arith.constant 0 : i32
    return %arg0, %c0_i32 : i32, i32
  }
  func.func @transform_1(%arg0: i32, %arg1: i32) -> (i32, i32) {
    %c0_i32 = arith.constant 0 : i32
    %c0_i32_0 = arith.constant 0 : i32
    return %arg1, %c0_i32 : i32, i32
  }
  func.func @transform_2(%arg0: i32, %arg1: i32) -> (i32, i32) {
    %c0_i32 = arith.constant 0 : i32
    %c0_i32_0 = arith.constant 0 : i32
    return %c0_i32, %arg1 : i32, i32
  }
  func.func @transform_3(%arg0: i32, %arg1: i32) -> (i32, i32) {
    %c0_i32 = arith.constant 0 : i32
    %c0_i32_0 = arith.constant 0 : i32
    return %arg0, %c0_i32 : i32, i32
  }
}

</mosaic_0001>

<llo_original>
// kernel: tpu_custom_call.1
$region0: #{tpu_custom_call.1}
  #allocation0 [shape = 'u32[]', space=smem, size = 0x4, offset = 0x4, fixed_abs, tag = 'smem constant byte address 0x4 - core index']
  #allocation1 [shape = 'u32[144,128]{1,0:T(1,128)}', space=vmem, size = 0x12000, scoped, tag = 'internal scratch']
  #allocation2 [shape = 'f32[16,1]{1,0:T(8,128)}', space=vmem, size = 0x2000, scoped, tag = 'scratch operand']
  #allocation3 [shape = 'f32[16,1]{1,0:T(8,128)}', space=vmem, size = 0x2000, scoped, tag = 'scratch operand']
  %s0 = inlined_call_operand.hbm [shape: bf16[32,128], index: 0, kind: input, shape index: {}]
  %s1 = inlined_call_operand.hbm [shape: bf16[2048,128], index: 1, kind: input, shape index: {}]
  %s2 = inlined_call_operand.hbm [shape: f32[1,2048], index: 2, kind: input, shape index: {}]
  %s3 = inlined_call_operand.hbm [shape: f32[32,2048], index: 3, kind: output, shape index: {}]
  %s4 = sld [smem:[#allocation0]]
  $region65: #{tpu_custom_call.1} parent=0
    _
  %s6 = ssub.s32 1, %s4
  %s7 = scalar_select 0, %s6, %s4
  $region1: #{tpu_custom_call.1} parent=0
    #allocation4 [shape = 'u8[8192]{0}', space=vmem, size = 0x2000, scoped, tag = 'input window, operand 0']
    #allocation5 [shape = 's32[2]{0}', space=sflag, size = 0x8, scoped, tag = 'scoped memory for tpu_custom_call.1']
    #allocation6 [shape = 's32[2]{0}', space=sflag, size = 0x8, scoped, tag = 'scoped memory for tpu_custom_call.1']
    #allocation7 [shape = 'u8[524288]{0}', space=vmem, size = 0x80000, scoped, tag = 'input window, operand 1']
    #allocation8 [shape = 's32[2]{0}', space=sflag, size = 0x8, scoped, tag = 'scoped memory for tpu_custom_call.1']
    #allocation9 [shape = 'u8[8192]{0}', space=vmem, size = 0x2000, scoped, tag = 'input window, operand 2']
    #allocation10 [shape = 'u8[262144]{0}', space=vmem, size = 0x40000, scoped, tag = 'output window, operand 0']
    %8 = vsyncpa [#allocation5], 0
    %s9 = scalar_lea.sflag [#allocation5], 1
    %10 = vsyncpa %s9, 0
    %11 = vsyncpa [#allocation8], 0
    %s12 = scalar_lea.sflag [#allocation8], 1
    %13 = vsyncpa %s12, 0
    %14 = vsyncpa [#allocation6], 0
    %s15 = scalar_lea.sflag [#allocation6], 1
    %16 = vsyncpa %s15, 0
    loop: start=0, step=1, limit=6
    $region2: #{tpu_custom_call.1} parent=1 // loop_pre_header
      _
    $region3: #{tpu_custom_call.1} parent=1 // loop_header
      %s18 = sphi 0, %s22
      %p19 = scmp.ge.s32.totalorder %s18, 6
      %s25 = sphi 0, %s37
      %s26 = sphi 0, %s33
      %s27 = sphi 0, %s25
      %s28 = sphi 0, %s26
      %s29 = sphi 0, %s27
      %s30 = sphi 0, %s28
      %s40 = sphi 0, %s42
      %s43 = sphi 0, %s40
      %s44 = sphi 0, %s43
      %s60 = sphi 0, %s44
      %s66 = sphi 0, %s68
      %s69 = sphi 0, %s66
      %s70 = sphi 0, %s69
      %s86 = sphi 0, %s70
      %s92 = sphi 0, %s94
      %s95 = sphi 0, %s92
      %s96 = sphi 0, %s95
      %s112 = sphi 0, %s96
      %s118 = sphi 0, %s120
      %s121 = sphi 0, %s118
      %s122 = sphi 0, %s121
      %s138 = sphi 0, %s122
    $region4: #{tpu_custom_call.1} parent=1 // loop_header_branch
      %21 = sbr.rel (%p19) target = $region8
    $region5: #{tpu_custom_call.1} parent=1 // loop_body
      %s23 = ssub.s32 %s18, 1
      %s24 = ssub.s32 %s18, 2
      %s31 = sadd.s32 1, %s26
      %p32 = scmp.ge.s32.totalorder %s31, 2
      %s33 = scalar_select %p32, 0, %s31
      %s34 = sadd.s32 1, %s25
      %s35 = scalar_select %p32, %s34, %s25
      %p36 = scmp.ge.s32.totalorder %s35, 2
      %s37 = scalar_select %p36, 0, %s35
      %s38 = ssub.s32 %s25, %s37
      %p39 = scmp.eq.s32.totalorder %s38, 0
      %s41 = sadd.s32 %s40, 1
      %s42 = scalar_select %p39, %s40, %s41
      %p45 = pneg %p39
      %p46 = scmp.eq.s32.totalorder %s18, 3
      %p47 = por %p45, %p46
      %p48 = scmp.ne.s32.totalorder %s40, %s43
      %p49 = scmp.eq.s32.totalorder %s18, 0
      %p50 = por %p48, %p49
      %p51 = scmp.ne.s32.totalorder %s40, %s43
      %p52 = scmp.eq.s32.totalorder %s23, 3
      %p53 = por %p51, %p52
      %p54 = scmp.ne.s32.totalorder %s43, %s44
      %p55 = scmp.eq.s32.totalorder %s23, 0
      %p56 = por %p54, %p55
      %p57 = scmp.ne.s32.totalorder %s43, %s44
      %p58 = scmp.eq.s32.totalorder %s24, 3
      %p59 = por %p57, %p58
      %p61 = scmp.ne.s32.totalorder %s44, %s60
      %p62 = scmp.eq.s32.totalorder %s24, 0
      %p63 = por %p61, %p62
      %s64 = ssub.s32 %s26, %s33
      %p65 = scmp.eq.s32.totalorder %s64, 0
      %s67 = sadd.s32 %s66, 1
      %s68 = scalar_select %p65, %s66, %s67
      %p71 = pneg %p65
      %p72 = scmp.eq.s32.totalorder %s18, 3
      %p73 = por %p71, %p72
      %p74 = scmp.ne.s32.totalorder %s66, %s69
      %p75 = scmp.eq.s32.totalorder %s18, 0
      %p76 = por %p74, %p75
      %p77 = scmp.ne.s32.totalorder %s66, %s69
      %p78 = scmp.eq.s32.totalorder %s23, 3
      %p79 = por %p77, %p78
      %p80 = scmp.ne.s32.totalorder %s69, %s70
      %p81 = scmp.eq.s32.totalorder %s23, 0
      %p82 = por %p80, %p81
      %p83 = scmp.ne.s32.totalorder %s69, %s70
      %p84 = scmp.eq.s32.totalorder %s24, 3
      %p85 = por %p83, %p84
      %p87 = scmp.ne.s32.totalorder %s70, %s86
      %p88 = scmp.eq.s32.totalorder %s24, 0
      %p89 = por %p87, %p88
      %s90 = ssub.s32 %s26, %s33
      %p91 = scmp.eq.s32.totalorder %s90, 0
      %s93 = sadd.s32 %s92, 1
      %s94 = scalar_select %p91, %s92, %s93
      %p97 = pneg %p91
      %p98 = scmp.eq.s32.totalorder %s18, 3
      %p99 = por %p97, %p98
      %p100 = scmp.ne.s32.totalorder %s92, %s95
      %p101 = scmp.eq.s32.totalorder %s18, 0
      %p102 = por %p100, %p101
      %p103 = scmp.ne.s32.totalorder %s92, %s95
      %p104 = scmp.eq.s32.totalorder %s23, 3
      %p105 = por %p103, %p104
      %p106 = scmp.ne.s32.totalorder %s95, %s96
      %p107 = scmp.eq.s32.totalorder %s23, 0
      %p108 = por %p106, %p107
      %p109 = scmp.ne.s32.totalorder %s95, %s96
      %p110 = scmp.eq.s32.totalorder %s24, 3
      %p111 = por %p109, %p110
      %p113 = scmp.ne.s32.totalorder %s96, %s112
      %p114 = scmp.eq.s32.totalorder %s24, 0
      %p115 = por %p113, %p114
      %s116 = ssub.s32 %s25, %s37
      %p117 = scmp.eq.s32.totalorder %s116, 0
      %s119 = sadd.s32 %s118, 1
      %s120 = scalar_select %p117, %s118, %s119
      %p123 = pneg %p117
      %p124 = scmp.eq.s32.totalorder %s18, 3
      %p125 = por %p123, %p124
      %p126 = scmp.ne.s32.totalorder %s118, %s121
      %p127 = scmp.eq.s32.totalorder %s18, 0
      %p128 = por %p126, %p127
      %p129 = scmp.ne.s32.totalorder %s118, %s121
      %p130 = scmp.eq.s32.totalorder %s23, 3
      %p131 = por %p129, %p130
      %p132 = scmp.ne.s32.totalorder %s121, %s122
      %p133 = scmp.eq.s32.totalorder %s23, 0
      %p134 = por %p132, %p133
      %p135 = scmp.ne.s32.totalorder %s121, %s122
      %p136 = scmp.eq.s32.totalorder %s24, 3
      %p137 = por %p135, %p136
      %p139 = scmp.ne.s32.totalorder %s122, %s138
      %p140 = scmp.eq.s32.totalorder %s24, 0
      %p141 = por %p139, %p140
      %p142 = scmp.le.s32.totalorder 1, %s18
      %p143 = scmp.lt.s32.totalorder %s18, 5
      %p144 = pnand %p142, %p143
      %p145 = pneg %p144
      // Predicated region
      $region9: #{tpu_custom_call.1} parent=5 // pred_check
        _
      $region10: #{tpu_custom_call.1} parent=5 // pred_check_branch
        %147 = sbr.rel (%p144) target = $region12
      $region11: #{tpu_custom_call.1} parent=5 // pred_region
        %s148 = ssub.s32 %s18, 1
      $region12: #{tpu_custom_call.1} parent=5 // pred_fallthru
        _
      %p149 = scmp.lt.s32.totalorder %s18, 4
      // Predicated region
      $region13: #{tpu_custom_call.1} parent=5 // pred_check
        %p150 = pneg %p149
      $region14: #{tpu_custom_call.1} parent=5 // pred_check_branch
        %152 = sbr.rel (%p150) target = $region16
      $region15: #{tpu_custom_call.1} parent=5 // pred_region
        // Predicated region
        $region17: #{tpu_custom_call.1} parent=15 // pred_check
          %p153 = pneg %p50
        $region18: #{tpu_custom_call.1} parent=15 // pred_check_branch
          %155 = sbr.rel (%p153) target = $region20
        $region19: #{tpu_custom_call.1} parent=15 // pred_region
          %s156 = sand.u32 %s40, 1
          %s157 = scalar_lea.sflag [#allocation5], %s156
          %s158 = sand.u32 %s40, 1
          %s159 = smul.addr %s158, 8
          %s160 = scalar_lea.vmem [#allocation4], %s159
          %s161 = smul.u32 2, %s25
          %s163 = ssub.s32 128, 128
          %164 = vsyncadd %s157, %s163
          %s165 = smul.addr %s161, 64
          %s166 = scalar_lea.hbm %s0, %s165
          %s167 = sshll.u32 %s160, 4
          %s168 = int_to_ptr.vmem [resolvable:$true] %s167
          %173 = dma.hbm_to_vmem [thread:$0]  %s166, 128, %s168, %s157, 64, 64, 4
        $region20: #{tpu_custom_call.1} parent=15 // pred_fallthru
          _
        // Predicated region
        $region21: #{tpu_custom_call.1} parent=15 // pred_check
          %p174 = pneg %p76
        $region22: #{tpu_custom_call.1} parent=15 // pred_check_branch
          %176 = sbr.rel (%p174) target = $region24
        $region23: #{tpu_custom_call.1} parent=15 // pred_region
          %s177 = sand.u32 %s18, 1
          %s178 = scalar_lea.sflag [#allocation8], %s177
          %s179 = sand.u32 %s66, 1
          %s180 = smul.addr %s179, 512
          %s181 = scalar_lea.vmem [#allocation7], %s180
          %s182 = smul.u32 128, %s26
          %s184 = ssub.s32 8192, 8192
          %185 = vsyncadd %s178, %s184
          %s186 = smul.addr %s182, 64
          %s187 = scalar_lea.hbm %s1, %s186
          %s188 = sshll.u32 %s181, 4
          %s189 = int_to_ptr.vmem [resolvable:$true] %s188
          %194 = dma.hbm_to_vmem [thread:$0]  %s187, 8192, %s189, %s178, 64, 64, 4
        $region24: #{tpu_custom_call.1} parent=15 // pred_fallthru
          _
        // Predicated region
        $region25: #{tpu_custom_call.1} parent=15 // pred_check
          %p195 = pneg %p102
        $region26: #{tpu_custom_call.1} parent=15 // pred_check_branch
          %197 = sbr.rel (%p195) target = $region28
        $region27: #{tpu_custom_call.1} parent=15 // pred_region
          %s198 = sand.u32 %s18, 1
          %s199 = scalar_lea.sflag [#allocation8], %s198
          %s200 = sand.u32 %s92, 1
          %s201 = smul.addr %s200, 8
          %s202 = scalar_lea.vmem [#allocation9], %s201
          %s203 = smul.u32 8, %s26
          %s205 = ssub.s32 128, 128
          %206 = vsyncadd %s199, %s205
          %s207 = smul.addr %s203, 16
          %s208 = scalar_lea.hbm %s2, %s207
          %s210 = sshll.u32 %s202, 4
          %s211 = int_to_ptr.vmem [resolvable:$true] %s210
          %213 = dma.hbm_to_vmem [thread:$0]  %s208, 128, %s211, %s199
        $region28: #{tpu_custom_call.1} parent=15 // pred_fallthru
          _
      $region16: #{tpu_custom_call.1} parent=5 // pred_fallthru
        _
      %p214 = scmp.le.s32.totalorder 1, %s18
      %p215 = scmp.lt.s32.totalorder %s18, 5
      %p216 = pnand %p214, %p215
      %p217 = pneg %p216
      // Predicated region
      $region29: #{tpu_custom_call.1} parent=5 // pred_check
        _
      $region30: #{tpu_custom_call.1} parent=5 // pred_check_branch
        %219 = sbr.rel (%p216) target = $region32
      $region31: #{tpu_custom_call.1} parent=5 // pred_region
        %s220 = ssub.s32 %s18, 1
        %s221 = sand.u32 %s43, 1
        %s222 = scalar_lea.sflag [#allocation5], %s221
        %s223 = sand.u32 %s43, 1
        %s224 = smul.addr %s223, 8
        %s225 = scalar_lea.vmem [#allocation4], %s224
        // Predicated region
        $region33: #{tpu_custom_call.1} parent=31 // pred_check
          %p226 = pneg %p56
        $region34: #{tpu_custom_call.1} parent=31 // pred_check_branch
          %228 = sbr.rel (%p226) target = $region36
        $region35: #{tpu_custom_call.1} parent=31 // pred_region
          %229 = dma.done %s222, 128
        $region36: #{tpu_custom_call.1} parent=31 // pred_fallthru
          _
        %s230 = sand.u32 %s23, 1
        %s231 = scalar_lea.sflag [#allocation8], %s230
        %s232 = sand.u32 %s69, 1
        %s233 = smul.addr %s232, 512
        %s234 = scalar_lea.vmem [#allocation7], %s233
        // Predicated region
        $region37: #{tpu_custom_call.1} parent=31 // pred_check
          %p235 = pneg %p82
        $region38: #{tpu_custom_call.1} parent=31 // pred_check_branch
          %237 = sbr.rel (%p235) target = $region40
        $region39: #{tpu_custom_call.1} parent=31 // pred_region
          %238 = dma.done %s231, 8192
        $region40: #{tpu_custom_call.1} parent=31 // pred_fallthru
          _
        %s239 = sand.u32 %s23, 1
        %s240 = scalar_lea.sflag [#allocation8], %s239
        %s241 = sand.u32 %s95, 1
        %s242 = smul.addr %s241, 8
        %s243 = scalar_lea.vmem [#allocation9], %s242
        // Predicated region
        $region41: #{tpu_custom_call.1} parent=31 // pred_check
          %p244 = pneg %p108
        $region42: #{tpu_custom_call.1} parent=31 // pred_check_branch
          %246 = sbr.rel (%p244) target = $region44
        $region43: #{tpu_custom_call.1} parent=31 // pred_region
          %247 = dma.done %s240, 128
        $region44: #{tpu_custom_call.1} parent=31 // pred_fallthru
          _
        %s248 = sand.u32 %s43, 1
        %s249 = scalar_lea.sflag [#allocation5], %s248
        %s250 = sand.u32 %s43, 1
        %s251 = smul.addr %s250, 8
        %s252 = scalar_lea.vmem [#allocation4], %s251
        %p253 = pneg %p56
        %p254 = pneg %p53
        %s255 = sand.u32 %s23, 1
        %s256 = scalar_lea.sflag [#allocation8], %s255
        %s257 = sand.u32 %s69, 1
        %s258 = smul.addr %s257, 512
        %s259 = scalar_lea.vmem [#allocation7], %s258
        %p260 = pneg %p82
        %p261 = pneg %p79
        %s262 = sand.u32 %s23, 1
        %s263 = scalar_lea.sflag [#allocation8], %s262
        %s264 = sand.u32 %s95, 1
        %s265 = smul.addr %s264, 8
        %s266 = scalar_lea.vmem [#allocation9], %s265
        %p267 = pneg %p108
        %p268 = pneg %p105
        %p269 = pneg %p134
        %p270 = pneg %p131
        %s271 = sand.u32 %s121, 1
        %s272 = scalar_lea.sflag [#allocation6], %s271
        %s273 = sand.u32 %s121, 1
        %s274 = smul.addr %s273, 256
        %s275 = scalar_lea.vmem [#allocation10], %s274
        %s276 = smul.u32 2, %s27
        %s277 = smul.u32 128, %s28
        %s278 = smul.u32 8, %s28
        %s279 = smul.u32 2, %s27
        %p281 = scmp.eq.s32.totalorder %s28, 0
        // Predicated region
        $region45: #{tpu_custom_call.1} parent=31 // pred_check
          %p282 = pneg %p281
        $region46: #{tpu_custom_call.1} parent=31 // pred_check_branch
          %284 = sbr.rel (%p282) target = $region48
        $region47: #{tpu_custom_call.1} parent=31 // pred_region
          %vm285 = vcmask 7168
          %286 = vst.msk [vmem:[#allocation2] sm:$0xff] %vm285, -inf
          %287 = vst.msk [vmem:[#allocation2 + $0x8] sm:$0xff] %vm285, -inf
          %288 = vst.msk [vmem:[#allocation3] sm:$0xff] %vm285, 0.0
          %289 = vst.msk [vmem:[#allocation3 + $0x8] sm:$0xff] %vm285, 0.0
        $region48: #{tpu_custom_call.1} parent=31 // pred_fallthru
          _
        %v290 = vld [vmem:[%s225] sm:$0xf]
        %v291 = vld [vmem:[%s225 + $0x4] sm:$0xf]
        %v292 = vld [vmem:[%s234] sm:$0xf]
        %v293 = vld [vmem:[%s234 + $0x4] sm:$0xf]
        %v294 = vld [vmem:[%s234 + $0x8] sm:$0xf]
        %v295 = vld [vmem:[%s234 + $0xc] sm:$0xf]
        %v296 = vld [vmem:[%s234 + $0x10] sm:$0xf]
        %v297 = vld [vmem:[%s234 + $0x14] sm:$0xf]
        %v298 = vld [vmem:[%s234 + $0x18] sm:$0xf]
        %v299 = vld [vmem:[%s234 + $0x1c] sm:$0xf]
        %v300 = vld [vmem:[%s234 + $0x20] sm:$0xf]
        %v301 = vld [vmem:[%s234 + $0x24] sm:$0xf]
        %v302 = vld [vmem:[%s234 + $0x28] sm:$0xf]
        %v303 = vld [vmem:[%s234 + $0x2c] sm:$0xf]
        %v304 = vld [vmem:[%s234 + $0x30] sm:$0xf]
        %v305 = vld [vmem:[%s234 + $0x34] sm:$0xf]
        %v306 = vld [vmem:[%s234 + $0x38] sm:$0xf]
        %v307 = vld [vmem:[%s234 + $0x3c] sm:$0xf]
        %v308 = vld [vmem:[%s234 + $0x40] sm:$0xf]
        %v309 = vld [vmem:[%s234 + $0x44] sm:$0xf]
        %v310 = vld [vmem:[%s234 + $0x48] sm:$0xf]
        %v311 = vld [vmem:[%s234 + $0x4c] sm:$0xf]
        %v312 = vld [vmem:[%s234 + $0x50] sm:$0xf]
        %v313 = vld [vmem:[%s234 + $0x54] sm:$0xf]
        %v314 = vld [vmem:[%s234 + $0x58] sm:$0xf]
        %v315 = vld [vmem:[%s234 + $0x5c] sm:$0xf]
        %v316 = vld [vmem:[%s234 + $0x60] sm:$0xf]
        %v317 = vld [vmem:[%s234 + $0x64] sm:$0xf]
        %v318 = vld [vmem:[%s234 + $0x68] sm:$0xf]
        %v319 = vld [vmem:[%s234 + $0x6c] sm:$0xf]
        %v320 = vld [vmem:[%s234 + $0x70] sm:$0xf]
        %v321 = vld [vmem:[%s234 + $0x74] sm:$0xf]
        %v322 = vld [vmem:[%s234 + $0x78] sm:$0xf]
        %v323 = vld [vmem:[%s234 + $0x7c] sm:$0xf]
        %v324 = vld [vmem:[%s234 + $0x80] sm:$0xf]
        %v325 = vld [vmem:[%s234 + $0x84] sm:$0xf]
        %v326 = vld [vmem:[%s234 + $0x88] sm:$0xf]
        %v327 = vld [vmem:[%s234 + $0x8c] sm:$0xf]
        %v328 = vld [vmem:[%s234 + $0x90] sm:$0xf]
        %v329 = vld [vmem:[%s234 + $0x94] sm:$0xf]
        %v330 = vld [vmem:[%s234 + $0x98] sm:$0xf]
        %v331 = vld [vmem:[%s234 + $0x9c] sm:$0xf]
        %v332 = vld [vmem:[%s234 + $0xa0] sm:$0xf]
        %v333 = vld [vmem:[%s234 + $0xa4] sm:$0xf]
        %v334 = vld [vmem:[%s234 + $0xa8] sm:$0xf]
        %v335 = vld [vmem:[%s234 + $0xac] sm:$0xf]
        %v336 = vld [vmem:[%s234 + $0xb0] sm:$0xf]
        %v337 = vld [vmem:[%s234 + $0xb4] sm:$0xf]
        %v338 = vld [vmem:[%s234 + $0xb8] sm:$0xf]
        %v339 = vld [vmem:[%s234 + $0xbc] sm:$0xf]
        %v340 = vld [vmem:[%s234 + $0xc0] sm:$0xf]
        %v341 = vld [vmem:[%s234 + $0xc4] sm:$0xf]
        %v342 = vld [vmem:[%s234 + $0xc8] sm:$0xf]
        %v343 = vld [vmem:[%s234 + $0xcc] sm:$0xf]
        %v344 = vld [vmem:[%s234 + $0xd0] sm:$0xf]
        %v345 = vld [vmem:[%s234 + $0xd4] sm:$0xf]
        %v346 = vld [vmem:[%s234 + $0xd8] sm:$0xf]
        %v347 = vld [vmem:[%s234 + $0xdc] sm:$0xf]
        %v348 = vld [vmem:[%s234 + $0xe0] sm:$0xf]
        %v349 = vld [vmem:[%s234 + $0xe4] sm:$0xf]
        %v350 = vld [vmem:[%s234 + $0xe8] sm:$0xf]
        %v351 = vld [vmem:[%s234 + $0xec] sm:$0xf]
        %v352 = vld [vmem:[%s234 + $0xf0] sm:$0xf]
        %v353 = vld [vmem:[%s234 + $0xf4] sm:$0xf]
        %v354 = vld [vmem:[%s234 + $0xf8] sm:$0xf]
        %v355 = vld [vmem:[%s234 + $0xfc] sm:$0xf]
        %v356 = vld [vmem:[%s234 + $0x100] sm:$0xf]
        %v357 = vld [vmem:[%s234 + $0x104] sm:$0xf]
        %v358 = vld [vmem:[%s234 + $0x108] sm:$0xf]
        %v359 = vld [vmem:[%s234 + $0x10c] sm:$0xf]
        %v360 = vld [vmem:[%s234 + $0x110] sm:$0xf]
        %v361 = vld [vmem:[%s234 + $0x114] sm:$0xf]
        %v362 = vld [vmem:[%s234 + $0x118] sm:$0xf]
        %v363 = vld [vmem:[%s234 + $0x11c] sm:$0xf]
        %v364 = vld [vmem:[%s234 + $0x120] sm:$0xf]
        %v365 = vld [vmem:[%s234 + $0x124] sm:$0xf]
        %v366 = vld [vmem:[%s234 + $0x128] sm:$0xf]
        %v367 = vld [vmem:[%s234 + $0x12c] sm:$0xf]
        %v368 = vld [vmem:[%s234 + $0x130] sm:$0xf]
        %v369 = vld [vmem:[%s234 + $0x134] sm:$0xf]
        %v370 = vld [vmem:[%s234 + $0x138] sm:$0xf]
        %v371 = vld [vmem:[%s234 + $0x13c] sm:$0xf]
        %v372 = vld [vmem:[%s234 + $0x140] sm:$0xf]
        %v373 = vld [vmem:[%s234 + $0x144] sm:$0xf]
        %v374 = vld [vmem:[%s234 + $0x148] sm:$0xf]
        %v375 = vld [vmem:[%s234 + $0x14c] sm:$0xf]
        %v376 = vld [vmem:[%s234 + $0x150] sm:$0xf]
        %v377 = vld [vmem:[%s234 + $0x154] sm:$0xf]
        %v378 = vld [vmem:[%s234 + $0x158] sm:$0xf]
        %v379 = vld [vmem:[%s234 + $0x15c] sm:$0xf]
        %v380 = vld [vmem:[%s234 + $0x160] sm:$0xf]
        %v381 = vld [vmem:[%s234 + $0x164] sm:$0xf]
        %v382 = vld [vmem:[%s234 + $0x168] sm:$0xf]
        %v383 = vld [vmem:[%s234 + $0x16c] sm:$0xf]
        %v384 = vld [vmem:[%s234 + $0x170] sm:$0xf]
        %v385 = vld [vmem:[%s234 + $0x174] sm:$0xf]
        %v386 = vld [vmem:[%s234 + $0x178] sm:$0xf]
        %v387 = vld [vmem:[%s234 + $0x17c] sm:$0xf]
        %v388 = vld [vmem:[%s234 + $0x180] sm:$0xf]
        %v389 = vld [vmem:[%s234 + $0x184] sm:$0xf]
        %v390 = vld [vmem:[%s234 + $0x188] sm:$0xf]
        %v391 = vld [vmem:[%s234 + $0x18c] sm:$0xf]
        %v392 = vld [vmem:[%s234 + $0x190] sm:$0xf]
        %v393 = vld [vmem:[%s234 + $0x194] sm:$0xf]
        %v394 = vld [vmem:[%s234 + $0x198] sm:$0xf]
        %v395 = vld [vmem:[%s234 + $0x19c] sm:$0xf]
        %v396 = vld [vmem:[%s234 + $0x1a0] sm:$0xf]
        %v397 = vld [vmem:[%s234 + $0x1a4] sm:$0xf]
        %v398 = vld [vmem:[%s234 + $0x1a8] sm:$0xf]
        %v399 = vld [vmem:[%s234 + $0x1ac] sm:$0xf]
        %v400 = vld [vmem:[%s234 + $0x1b0] sm:$0xf]
        %v401 = vld [vmem:[%s234 + $0x1b4] sm:$0xf]
        %v402 = vld [vmem:[%s234 + $0x1b8] sm:$0xf]
        %v403 = vld [vmem:[%s234 + $0x1bc] sm:$0xf]
        %v404 = vld [vmem:[%s234 + $0x1c0] sm:$0xf]
        %v405 = vld [vmem:[%s234 + $0x1c4] sm:$0xf]
        %v406 = vld [vmem:[%s234 + $0x1c8] sm:$0xf]
        %v407 = vld [vmem:[%s234 + $0x1cc] sm:$0xf]
        %v408 = vld [vmem:[%s234 + $0x1d0] sm:$0xf]
        %v409 = vld [vmem:[%s234 + $0x1d4] sm:$0xf]
        %v410 = vld [vmem:[%s234 + $0x1d8] sm:$0xf]
        %v411 = vld [vmem:[%s234 + $0x1dc] sm:$0xf]
        %v412 = vld [vmem:[%s234 + $0x1e0] sm:$0xf]
        %v413 = vld [vmem:[%s234 + $0x1e4] sm:$0xf]
        %v414 = vld [vmem:[%s234 + $0x1e8] sm:$0xf]
        %v415 = vld [vmem:[%s234 + $0x1ec] sm:$0xf]
        %v416 = vld [vmem:[%s234 + $0x1f0] sm:$0xf]
        %v417 = vld [vmem:[%s234 + $0x1f4] sm:$0xf]
        %v418 = vld [vmem:[%s234 + $0x1f8] sm:$0xf]
        %v419 = vld [vmem:[%s234 + $0x1fc] sm:$0xf]
        %v420 = vld [vmem:[%s243] sm:$0xff]
        %v422 = vlaneseq
        %v423 = vshrl.u32 %v422, 7
        %v424 = vsub.s32 0, %v423
        %v425 = vrot.slane %v420, %v424
        %v426 = vlaneseq
        %v427 = vshrl.u32 %v426, 7
        %v428 = vsub.s32 1, %v427
        %v429 = vrot.slane %v420, %v428
        %v430 = vlaneseq
        %v431 = vshrl.u32 %v430, 7
        %v432 = vsub.s32 2, %v431
        %v433 = vrot.slane %v420, %v432
        %v434 = vlaneseq
        %v435 = vshrl.u32 %v434, 7
        %v436 = vsub.s32 3, %v435
        %v437 = vrot.slane %v420, %v436
        %v438 = vlaneseq
        %v439 = vshrl.u32 %v438, 7
        %v440 = vsub.s32 4, %v439
        %v441 = vrot.slane %v420, %v440
        %v442 = vlaneseq
        %v443 = vshrl.u32 %v442, 7
        %v444 = vsub.s32 5, %v443
        %v445 = vrot.slane %v420, %v444
        %v446 = vlaneseq
        %v447 = vshrl.u32 %v446, 7
        %v448 = vsub.s32 6, %v447
        %v449 = vrot.slane %v420, %v448
        %v450 = vlaneseq
        %v451 = vshrl.u32 %v450, 7
        %v452 = vsub.s32 7, %v451
        %v453 = vrot.slane %v420, %v452
        %v464 = vunpack.c.l.b16 %v290
        %v465 = vunpack.c.l.b16 %v291
        %v466 = vpack.c.b16 %v465, %v464
        %v596 = vunpack.c.l.b16 %v292
        %v597 = vunpack.c.l.b16 %v293
        %v598 = vunpack.c.l.b16 %v294
        %v599 = vunpack.c.l.b16 %v295
        %v600 = vunpack.c.l.b16 %v296
        %v601 = vunpack.c.l.b16 %v297
        %v602 = vunpack.c.l.b16 %v298
        %v603 = vunpack.c.l.b16 %v299
        %v604 = vunpack.c.l.b16 %v300
        %v605 = vunpack.c.l.b16 %v301
        %v606 = vunpack.c.l.b16 %v302
        %v607 = vunpack.c.l.b16 %v303
        %v608 = vunpack.c.l.b16 %v304
        %v609 = vunpack.c.l.b16 %v305
        %v610 = vunpack.c.l.b16 %v306
        %v611 = vunpack.c.l.b16 %v307
        %v612 = vunpack.c.l.b16 %v308
        %v613 = vunpack.c.l.b16 %v309
        %v614 = vunpack.c.l.b16 %v310
        %v615 = vunpack.c.l.b16 %v311
        %v616 = vunpack.c.l.b16 %v312
        %v617 = vunpack.c.l.b16 %v313
        %v618 = vunpack.c.l.b16 %v314
        %v619 = vunpack.c.l.b16 %v315
        %v620 = vunpack.c.l.b16 %v316
        %v621 = vunpack.c.l.b16 %v317
        %v622 = vunpack.c.l.b16 %v318
        %v623 = vunpack.c.l.b16 %v319
        %v624 = vunpack.c.l.b16 %v320
        %v625 = vunpack.c.l.b16 %v321
        %v626 = vunpack.c.l.b16 %v322
        %v627 = vunpack.c.l.b16 %v323
        %v628 = vunpack.c.l.b16 %v324
        %v629 = vunpack.c.l.b16 %v325
        %v630 = vunpack.c.l.b16 %v326
        %v631 = vunpack.c.l.b16 %v327
        %v632 = vunpack.c.l.b16 %v328
        %v633 = vunpack.c.l.b16 %v329
        %v634 = vunpack.c.l.b16 %v330
        %v635 = vunpack.c.l.b16 %v331
        %v636 = vunpack.c.l.b16 %v332
        %v637 = vunpack.c.l.b16 %v333
        %v638 = vunpack.c.l.b16 %v334
        %v639 = vunpack.c.l.b16 %v335
        %v640 = vunpack.c.l.b16 %v336
        %v641 = vunpack.c.l.b16 %v337
        %v642 = vunpack.c.l.b16 %v338
        %v643 = vunpack.c.l.b16 %v339
        %v644 = vunpack.c.l.b16 %v340
        %v645 = vunpack.c.l.b16 %v341
        %v646 = vunpack.c.l.b16 %v342
        %v647 = vunpack.c.l.b16 %v343
        %v648 = vunpack.c.l.b16 %v344
        %v649 = vunpack.c.l.b16 %v345
        %v650 = vunpack.c.l.b16 %v346
        %v651 = vunpack.c.l.b16 %v347
        %v652 = vunpack.c.l.b16 %v348
        %v653 = vunpack.c.l.b16 %v349
        %v654 = vunpack.c.l.b16 %v350
        %v655 = vunpack.c.l.b16 %v351
        %v656 = vunpack.c.l.b16 %v352
        %v657 = vunpack.c.l.b16 %v353
        %v658 = vunpack.c.l.b16 %v354
        %v659 = vunpack.c.l.b16 %v355
        %v660 = vunpack.c.l.b16 %v356
        %v661 = vunpack.c.l.b16 %v357
        %v662 = vunpack.c.l.b16 %v358
        %v663 = vunpack.c.l.b16 %v359
        %v664 = vunpack.c.l.b16 %v360
        %v665 = vunpack.c.l.b16 %v361
        %v666 = vunpack.c.l.b16 %v362
        %v667 = vunpack.c.l.b16 %v363
        %v668 = vunpack.c.l.b16 %v364
        %v669 = vunpack.c.l.b16 %v365
        %v670 = vunpack.c.l.b16 %v366
        %v671 = vunpack.c.l.b16 %v367
        %v672 = vunpack.c.l.b16 %v368
        %v673 = vunpack.c.l.b16 %v369
        %v674 = vunpack.c.l.b16 %v370
        %v675 = vunpack.c.l.b16 %v371
        %v676 = vunpack.c.l.b16 %v372
        %v677 = vunpack.c.l.b16 %v373
        %v678 = vunpack.c.l.b16 %v374
        %v679 = vunpack.c.l.b16 %v375
        %v680 = vunpack.c.l.b16 %v376
        %v681 = vunpack.c.l.b16 %v377
        %v682 = vunpack.c.l.b16 %v378
        %v683 = vunpack.c.l.b16 %v379
        %v684 = vunpack.c.l.b16 %v380
        %v685 = vunpack.c.l.b16 %v381
        %v686 = vunpack.c.l.b16 %v382
        %v687 = vunpack.c.l.b16 %v383
        %v688 = vunpack.c.l.b16 %v384
        %v689 = vunpack.c.l.b16 %v385
        %v690 = vunpack.c.l.b16 %v386
        %v691 = vunpack.c.l.b16 %v387
        %v692 = vunpack.c.l.b16 %v388
        %v693 = vunpack.c.l.b16 %v389
        %v694 = vunpack.c.l.b16 %v390
        %v695 = vunpack.c.l.b16 %v391
        %v696 = vunpack.c.l.b16 %v392
        %v697 = vunpack.c.l.b16 %v393
        %v698 = vunpack.c.l.b16 %v394
        %v699 = vunpack.c.l.b16 %v395
        %v700 = vunpack.c.l.b16 %v396
        %v701 = vunpack.c.l.b16 %v397
        %v702 = vunpack.c.l.b16 %v398
        %v703 = vunpack.c.l.b16 %v399
        %v704 = vunpack.c.l.b16 %v400
        %v705 = vunpack.c.l.b16 %v401
        %v706 = vunpack.c.l.b16 %v402
        %v707 = vunpack.c.l.b16 %v403
        %v708 = vunpack.c.l.b16 %v404
        %v709 = vunpack.c.l.b16 %v405
        %v710 = vunpack.c.l.b16 %v406
        %v711 = vunpack.c.l.b16 %v407
        %v712 = vunpack.c.l.b16 %v408
        %v713 = vunpack.c.l.b16 %v409
        %v714 = vunpack.c.l.b16 %v410
        %v715 = vunpack.c.l.b16 %v411
        %v716 = vunpack.c.l.b16 %v412
        %v717 = vunpack.c.l.b16 %v413
        %v718 = vunpack.c.l.b16 %v414
        %v719 = vunpack.c.l.b16 %v415
        %v720 = vunpack.c.l.b16 %v416
        %v721 = vunpack.c.l.b16 %v417
        %v722 = vunpack.c.l.b16 %v418
        %v723 = vunpack.c.l.b16 %v419
        %v724 = vpack.c.b16 %v597, %v596
        %v725 = vpack.c.b16 %v599, %v598
        %v726 = vpack.c.b16 %v601, %v600
        %v727 = vpack.c.b16 %v603, %v602
        %v728 = vpack.c.b16 %v605, %v604
        %v729 = vpack.c.b16 %v607, %v606
        %v730 = vpack.c.b16 %v609, %v608
        %v731 = vpack.c.b16 %v611, %v610
        %v732 = vpack.c.b16 %v613, %v612
        %v733 = vpack.c.b16 %v615, %v614
        %v734 = vpack.c.b16 %v617, %v616
        %v735 = vpack.c.b16 %v619, %v618
        %v736 = vpack.c.b16 %v621, %v620
        %v737 = vpack.c.b16 %v623, %v622
        %v738 = vpack.c.b16 %v625, %v624
        %v739 = vpack.c.b16 %v627, %v626
        %v740 = vpack.c.b16 %v629, %v628
        %v741 = vpack.c.b16 %v631, %v630
        %v742 = vpack.c.b16 %v633, %v632
        %v743 = vpack.c.b16 %v635, %v634
        %v744 = vpack.c.b16 %v637, %v636
        %v745 = vpack.c.b16 %v639, %v638
        %v746 = vpack.c.b16 %v641, %v640
        %v747 = vpack.c.b16 %v643, %v642
        %v748 = vpack.c.b16 %v645, %v644
        %v749 = vpack.c.b16 %v647, %v646
        %v750 = vpack.c.b16 %v649, %v648
        %v751 = vpack.c.b16 %v651, %v650
        %v752 = vpack.c.b16 %v653, %v652
        %v753 = vpack.c.b16 %v655, %v654
        %v754 = vpack.c.b16 %v657, %v656
        %v755 = vpack.c.b16 %v659, %v658
        %v756 = vpack.c.b16 %v661, %v660
        %v757 = vpack.c.b16 %v663, %v662
        %v758 = vpack.c.b16 %v665, %v664
        %v759 = vpack.c.b16 %v667, %v666
        %v760 = vpack.c.b16 %v669, %v668
        %v761 = vpack.c.b16 %v671, %v670
        %v762 = vpack.c.b16 %v673, %v672
        %v763 = vpack.c.b16 %v675, %v674
        %v764 = vpack.c.b16 %v677, %v676
        %v765 = vpack.c.b16 %v679, %v678
        %v766 = vpack.c.b16 %v681, %v680
        %v767 = vpack.c.b16 %v683, %v682
        %v768 = vpack.c.b16 %v685, %v684
        %v769 = vpack.c.b16 %v687, %v686
        %v770 = vpack.c.b16 %v689, %v688
        %v771 = vpack.c.b16 %v691, %v690
        %v772 = vpack.c.b16 %v693, %v692
        %v773 = vpack.c.b16 %v695, %v694
        %v774 = vpack.c.b16 %v697, %v696
        %v775 = vpack.c.b16 %v699, %v698
        %v776 = vpack.c.b16 %v701, %v700
        %v777 = vpack.c.b16 %v703, %v702
        %v778 = vpack.c.b16 %v705, %v704
        %v779 = vpack.c.b16 %v707, %v706
        %v780 = vpack.c.b16 %v709, %v708
        %v781 = vpack.c.b16 %v711, %v710
        %v782 = vpack.c.b16 %v713, %v712
        %v783 = vpack.c.b16 %v715, %v714
        %v784 = vpack.c.b16 %v717, %v716
        %v785 = vpack.c.b16 %v719, %v718
        %v786 = vpack.c.b16 %v721, %v720
        %v787 = vpack.c.b16 %v723, %v722
        %852 = vmatprep.subr.bf16.mxu0 0
        %853 = vmatpush1.bf16.xpose.msra.mxu0 %v724
        %854 = vmatprep.subr.bf16.mxu0 0
        %855 = vmatpush1.bf16.xpose.msra.mxu0 %v725
        %856 = vmatprep.subr.bf16.mxu0 0
        %857 = vmatpush1.bf16.xpose.msra.mxu0 %v726
        %858 = vmatprep.subr.bf16.mxu0 0
        %859 = vmatpush1.bf16.xpose.msra.mxu0 %v727
        %860 = vmatprep.subr.bf16.mxu0 0
        %861 = vmatpush1.bf16.xpose.msra.mxu0 %v728
        %862 = vmatprep.subr.bf16.mxu0 0
        %863 = vmatpush1.bf16.xpose.msra.mxu0 %v729
        %864 = vmatprep.subr.bf16.mxu0 0
        %865 = vmatpush1.bf16.xpose.msra.mxu0 %v730
        %866 = vmatprep.subr.bf16.mxu0 0
        %867 = vmatpush1.bf16.xpose.msra.mxu0 %v731
        %868 = vmatprep.subr.bf16.mxu0 0
        %869 = vmatpush1.bf16.xpose.msra.mxu0 %v732
        %870 = vmatprep.subr.bf16.mxu0 0
        %871 = vmatpush1.bf16.xpose.msra.mxu0 %v733
        %872 = vmatprep.subr.bf16.mxu0 0
        %873 = vmatpush1.bf16.xpose.msra.mxu0 %v734
        %874 = vmatprep.subr.bf16.mxu0 0
        %875 = vmatpush1.bf16.xpose.msra.mxu0 %v735
        %876 = vmatprep.subr.bf16.mxu0 0
        %877 = vmatpush1.bf16.xpose.msra.mxu0 %v736
        %878 = vmatprep.subr.bf16.mxu0 0
        %879 = vmatpush1.bf16.xpose.msra.mxu0 %v737
        %880 = vmatprep.subr.bf16.mxu0 0
        %881 = vmatpush1.bf16.xpose.msra.mxu0 %v738
        %882 = vmatprep.subr.bf16.mxu0 0
        %883 = vmatpush1.bf16.xpose.msra.mxu0 %v739
        %884 = vmatprep.mubr.bf16.mxu0 0
        %885 = vmatmul.mubr.bf16.gmra.mrb[0].mxu0 %v466
        %v886 = vpop.f32.mrb[0].mxu0
        %v887 = vadd.f32 %v425, %v886
        %v888 = vpop.f32.mrb[0].mxu0
        %v889 = vadd.f32 %v429, %v888
        %v890 = vpop.f32.mrb[0].mxu0
        %v891 = vadd.f32 %v425, %v890
        %v892 = vpop.f32.mrb[0].mxu0
        %v893 = vadd.f32 %v429, %v892
        %894 = vdwg.mxu0
        %895 = vmatprep.subr.bf16.mxu0 0
        %896 = vmatpush1.bf16.xpose.msra.mxu0 %v740
        %897 = vmatprep.subr.bf16.mxu0 0
        %898 = vmatpush1.bf16.xpose.msra.mxu0 %v741
        %899 = vmatprep.subr.bf16.mxu0 0
        %900 = vmatpush1.bf16.xpose.msra.mxu0 %v742
        %901 = vmatprep.subr.bf16.mxu0 0
        %902 = vmatpush1.bf16.xpose.msra.mxu0 %v743
        %903 = vmatprep.subr.bf16.mxu0 0
        %904 = vmatpush1.bf16.xpose.msra.mxu0 %v744
        %905 = vmatprep.subr.bf16.mxu0 0
        %906 = vmatpush1.bf16.xpose.msra.mxu0 %v745
        %907 = vmatprep.subr.bf16.mxu0 0
        %908 = vmatpush1.bf16.xpose.msra.mxu0 %v746
        %909 = vmatprep.subr.bf16.mxu0 0
        %910 = vmatpush1.bf16.xpose.msra.mxu0 %v747
        %911 = vmatprep.subr.bf16.mxu0 0
        %912 = vmatpush1.bf16.xpose.msra.mxu0 %v748
        %913 = vmatprep.subr.bf16.mxu0 0
        %914 = vmatpush1.bf16.xpose.msra.mxu0 %v749
        %915 = vmatprep.subr.bf16.mxu0 0
        %916 = vmatpush1.bf16.xpose.msra.mxu0 %v750
        %917 = vmatprep.subr.bf16.mxu0 0
        %918 = vmatpush1.bf16.xpose.msra.mxu0 %v751
        %919 = vmatprep.subr.bf16.mxu0 0
        %920 = vmatpush1.bf16.xpose.msra.mxu0 %v752
        %921 = vmatprep.subr.bf16.mxu0 0
        %922 = vmatpush1.bf16.xpose.msra.mxu0 %v753
        %923 = vmatprep.subr.bf16.mxu0 0
        %924 = vmatpush1.bf16.xpose.msra.mxu0 %v754
        %925 = vmatprep.subr.bf16.mxu0 0
        %926 = vmatpush1.bf16.xpose.msra.mxu0 %v755
        %927 = vmatprep.mubr.bf16.mxu0 0
        %928 = vmatmul.mubr.bf16.gmra.mrb[0].mxu0 %v466
        %v929 = vpop.f32.mrb[0].mxu0
        %v930 = vadd.f32 %v433, %v929
        %v931 = vpop.f32.mrb[0].mxu0
        %v932 = vadd.f32 %v437, %v931
        %v933 = vpop.f32.mrb[0].mxu0
        %v934 = vadd.f32 %v433, %v933
        %v935 = vpop.f32.mrb[0].mxu0
        %v936 = vadd.f32 %v437, %v935
        %937 = vdwg.mxu0
        %938 = vmatprep.subr.bf16.mxu0 0
        %939 = vmatpush1.bf16.xpose.msra.mxu0 %v756
        %940 = vmatprep.subr.bf16.mxu0 0
        %941 = vmatpush1.bf16.xpose.msra.mxu0 %v757
        %942 = vmatprep.subr.bf16.mxu0 0
        %943 = vmatpush1.bf16.xpose.msra.mxu0 %v758
        %944 = vmatprep.subr.bf16.mxu0 0
        %945 = vmatpush1.bf16.xpose.msra.mxu0 %v759
        %946 = vmatprep.subr.bf16.mxu0 0
        %947 = vmatpush1.bf16.xpose.msra.mxu0 %v760
        %948 = vmatprep.subr.bf16.mxu0 0
        %949 = vmatpush1.bf16.xpose.msra.mxu0 %v761
        %950 = vmatprep.subr.bf16.mxu0 0
        %951 = vmatpush1.bf16.xpose.msra.mxu0 %v762
        %952 = vmatprep.subr.bf16.mxu0 0
        %953 = vmatpush1.bf16.xpose.msra.mxu0 %v763
        %954 = vmatprep.subr.bf16.mxu0 0
        %955 = vmatpush1.bf16.xpose.msra.mxu0 %v764
        %956 = vmatprep.subr.bf16.mxu0 0
        %957 = vmatpush1.bf16.xpose.msra.mxu0 %v765
        %958 = vmatprep.subr.bf16.mxu0 0
        %959 = vmatpush1.bf16.xpose.msra.mxu0 %v766
        %960 = vmatprep.subr.bf16.mxu0 0
        %961 = vmatpush1.bf16.xpose.msra.mxu0 %v767
        %962 = vmatprep.subr.bf16.mxu0 0
        %963 = vmatpush1.bf16.xpose.msra.mxu0 %v768
        %964 = vmatprep.subr.bf16.mxu0 0
        %965 = vmatpush1.bf16.xpose.msra.mxu0 %v769
        %966 = vmatprep.subr.bf16.mxu0 0
        %967 = vmatpush1.bf16.xpose.msra.mxu0 %v770
        %968 = vmatprep.subr.bf16.mxu0 0
        %969 = vmatpush1.bf16.xpose.msra.mxu0 %v771
        %970 = vmatprep.mubr.bf16.mxu0 0
        %971 = vmatmul.mubr.bf16.gmra.mrb[0].mxu0 %v466
        %v972 = vpop.f32.mrb[0].mxu0
        %v973 = vadd.f32 %v441, %v972
        %v974 = vpop.f32.mrb[0].mxu0
        %v975 = vadd.f32 %v445, %v974
        %v976 = vpop.f32.mrb[0].mxu0
        %v977 = vadd.f32 %v441, %v976
        %v978 = vpop.f32.mrb[0].mxu0
        %v979 = vadd.f32 %v445, %v978
        %980 = vdwg.mxu0
        %981 = vmatprep.subr.bf16.mxu0 0
        %982 = vmatpush1.bf16.xpose.msra.mxu0 %v772
        %983 = vmatprep.subr.bf16.mxu0 0
        %984 = vmatpush1.bf16.xpose.msra.mxu0 %v773
        %985 = vmatprep.subr.bf16.mxu0 0
        %986 = vmatpush1.bf16.xpose.msra.mxu0 %v774
        %987 = vmatprep.subr.bf16.mxu0 0
        %988 = vmatpush1.bf16.xpose.msra.mxu0 %v775
        %989 = vmatprep.subr.bf16.mxu0 0
        %990 = vmatpush1.bf16.xpose.msra.mxu0 %v776
        %991 = vmatprep.subr.bf16.mxu0 0
        %992 = vmatpush1.bf16.xpose.msra.mxu0 %v777
        %993 = vmatprep.subr.bf16.mxu0 0
        %994 = vmatpush1.bf16.xpose.msra.mxu0 %v778
        %995 = vmatprep.subr.bf16.mxu0 0
        %996 = vmatpush1.bf16.xpose.msra.mxu0 %v779
        %997 = vmatprep.subr.bf16.mxu0 0
        %998 = vmatpush1.bf16.xpose.msra.mxu0 %v780
        %999 = vmatprep.subr.bf16.mxu0 0
        %1000 = vmatpush1.bf16.xpose.msra.mxu0 %v781
        %1001 = vmatprep.subr.bf16.mxu0 0
        %1002 = vmatpush1.bf16.xpose.msra.mxu0 %v782
        %1003 = vmatprep.subr.bf16.mxu0 0
        %1004 = vmatpush1.bf16.xpose.msra.mxu0 %v783
        %1005 = vmatprep.subr.bf16.mxu0 0
        %1006 = vmatpush1.bf16.xpose.msra.mxu0 %v784
        %1007 = vmatprep.subr.bf16.mxu0 0
        %1008 = vmatpush1.bf16.xpose.msra.mxu0 %v785
        %1009 = vmatprep.subr.bf16.mxu0 0
        %1010 = vmatpush1.bf16.xpose.msra.mxu0 %v786
        %1011 = vmatprep.subr.bf16.mxu0 0
        %1012 = vmatpush1.bf16.xpose.msra.mxu0 %v787
        %1013 = vmatprep.mubr.bf16.mxu0 0
        %1014 = vmatmul.mubr.bf16.gmra.mrb[0].mxu0 %v466
        %v1015 = vpop.f32.mrb[0].mxu0
        %v1016 = vadd.f32 %v449, %v1015
        %v1017 = vpop.f32.mrb[0].mxu0
        %v1018 = vadd.f32 %v453, %v1017
        %v1019 = vpop.f32.mrb[0].mxu0
        %v1020 = vadd.f32 %v449, %v1019
        %v1021 = vpop.f32.mrb[0].mxu0
        %v1022 = vadd.f32 %v453, %v1021
        %1023 = vdwg.mxu0
        %v1024 = vmax.f32 %v887, %v930
        %v1025 = vmax.f32 %v889, %v932
        %v1026 = vmax.f32 %v1024, %v973
        %v1027 = vmax.f32 %v1025, %v975
        %v1028 = vmax.f32 %v1026, %v1016
        %v1029 = vmax.f32 %v1027, %v1018
        %v1030 = vmax.f32 %v1028, %v1029
        %1031 = vmax.xlane.f32.xlu0 %v1030
        %v1032 = vpop.xlane.xlu0 %1031
        %v1033 = vmax.f32 %v891, %v934
        %v1034 = vmax.f32 %v893, %v936
        %v1035 = vmax.f32 %v1033, %v977
        %v1036 = vmax.f32 %v1034, %v979
        %v1037 = vmax.f32 %v1035, %v1020
        %v1038 = vmax.f32 %v1036, %v1022
        %v1039 = vmax.f32 %v1037, %v1038
        %1040 = vmax.xlane.f32.xlu0 %v1039
        %v1041 = vpop.xlane.xlu0 %1040
        %v1042 = vld [vmem:[#allocation2] sm:$0xff]
        %v1043 = vld [vmem:[#allocation2 + $0x8] sm:$0xff]
        %v1044 = vmax.f32 %v1042, %v1032
        %v1045 = vmax.f32 %v1043, %v1041
        %v1046 = vld [vmem:[#allocation3] sm:$0xff]
        %v1047 = vld [vmem:[#allocation3 + $0x8] sm:$0xff]
        %v1048 = vsub.f32 %v1042, %v1044
        %v1049 = vsub.f32 %v1043, %v1045
        %v1050 = vmul.f32 %v1048, 1.442695
        %v1051 = vpow.pop %v1050
        %v1052 = vmul.f32 %v1049, 1.442695
        %v1053 = vpow.pop %v1052
        %v1054 = vmul.f32 %v1046, %v1051
        %v1055 = vmul.f32 %v1047, %v1053
        %1057 = vset.pattern.permute.xlu0 0
        %1058 = vperm.xlu0 %1057, %v1044
        %v1059 = vpop.permute.xlu0 %1058
        %1062 = vset.pattern.permute.xlu0 0
        %1063 = vperm.xlu0 %1062, %v1045
        %v1064 = vpop.permute.xlu0 %1063
        %v1066 = vsub.f32 %v887, %v1059
        %v1067 = vsub.f32 %v889, %v1059
        %v1068 = vsub.f32 %v930, %v1059
        %v1069 = vsub.f32 %v932, %v1059
        %v1070 = vsub.f32 %v973, %v1059
        %v1071 = vsub.f32 %v975, %v1059
        %v1072 = vsub.f32 %v1016, %v1059
        %v1073 = vsub.f32 %v1018, %v1059
        %v1074 = vsub.f32 %v891, %v1064
        %v1075 = vsub.f32 %v893, %v1064
        %v1076 = vsub.f32 %v934, %v1064
        %v1077 = vsub.f32 %v936, %v1064
        %v1078 = vsub.f32 %v977, %v1064
        %v1079 = vsub.f32 %v979, %v1064
        %v1080 = vsub.f32 %v1020, %v1064
        %v1081 = vsub.f32 %v1022, %v1064
        %v1082 = vmul.f32 %v1066, 1.442695
        %v1083 = vpow.pop %v1082
        %v1084 = vmul.f32 %v1067, 1.442695
        %v1085 = vpow.pop %v1084
        %v1086 = vmul.f32 %v1068, 1.442695
        %v1087 = vpow.pop %v1086
        %v1088 = vmul.f32 %v1069, 1.442695
        %v1089 = vpow.pop %v1088
        %v1090 = vmul.f32 %v1070, 1.442695
        %v1091 = vpow.pop %v1090
        %v1092 = vmul.f32 %v1071, 1.442695
        %v1093 = vpow.pop %v1092
        %v1094 = vmul.f32 %v1072, 1.442695
        %v1095 = vpow.pop %v1094
        %v1096 = vmul.f32 %v1073, 1.442695
        %v1097 = vpow.pop %v1096
        %v1098 = vmul.f32 %v1074, 1.442695
        %v1099 = vpow.pop %v1098
        %v1100 = vmul.f32 %v1075, 1.442695
        %v1101 = vpow.pop %v1100
        %v1102 = vmul.f32 %v1076, 1.442695
        %v1103 = vpow.pop %v1102
        %v1104 = vmul.f32 %v1077, 1.442695
        %v1105 = vpow.pop %v1104
        %v1106 = vmul.f32 %v1078, 1.442695
        %v1107 = vpow.pop %v1106
        %v1108 = vmul.f32 %v1079, 1.442695
        %v1109 = vpow.pop %v1108
        %v1110 = vmul.f32 %v1080, 1.442695
        %v1111 = vpow.pop %v1110
        %v1112 = vmul.f32 %v1081, 1.442695
        %v1113 = vpow.pop %v1112
        %v1114 = vadd.f32 %v1083, %v1085
        %v1115 = vadd.f32 %v1114, %v1087
        %v1116 = vadd.f32 %v1115, %v1089
        %v1117 = vadd.f32 %v1116, %v1091
        %v1118 = vadd.f32 %v1117, %v1093
        %v1119 = vadd.f32 %v1118, %v1095
        %v1120 = vadd.f32 %v1119, %v1097
        %1121 = vadd.xlane.f32.xlu0 %v1120
        %v1122 = vpop.xlane.xlu0 %1121
        %v1123 = vadd.f32 %v1099, %v1101
        %v1124 = vadd.f32 %v1123, %v1103
        %v1125 = vadd.f32 %v1124, %v1105
        %v1126 = vadd.f32 %v1125, %v1107
        %v1127 = vadd.f32 %v1126, %v1109
        %v1128 = vadd.f32 %v1127, %v1111
        %v1129 = vadd.f32 %v1128, %v1113
        %1130 = vadd.xlane.f32.xlu0 %v1129
        %v1131 = vpop.xlane.xlu0 %1130
        %v1132 = vadd.f32 %v1054, %v1122
        %v1133 = vadd.f32 %v1055, %v1131
        %vm1134 = vcmask 7168
        %1135 = vst.msk [vmem:[#allocation3] sm:$0xff] %vm1134, %v1132
        %1136 = vst.msk [vmem:[#allocation3 + $0x8] sm:$0xff] %vm1134, %v1133
        %1137 = vst.msk [vmem:[#allocation2] sm:$0xff] %vm1134, %v1044
        %1138 = vst.msk [vmem:[#allocation2 + $0x8] sm:$0xff] %vm1134, %v1045
        %s1139 = smul.u32 %s28, 1024
        %s1140 = sshra.s32 %s1139, 7
        %s1141 = sand.u32 %s1139, 127
        %s1142 = smul.addr %s1140, 8
        %s1143 = scalar_lea.vmem %s275, %s1142 [#allocation10]
        %1144 = vst [vmem:[%s1143] sm:$0xff] %v887
        %1145 = vst [vmem:[%s1143 + $0x8] sm:$0xff] %v889
        %1146 = vst [vmem:[%s1143 + $0x10] sm:$0xff] %v930
        %1147 = vst [vmem:[%s1143 + $0x18] sm:$0xff] %v932
        %1148 = vst [vmem:[%s1143 + $0x20] sm:$0xff] %v973
        %1149 = vst [vmem:[%s1143 + $0x28] sm:$0xff] %v975
        %1150 = vst [vmem:[%s1143 + $0x30] sm:$0xff] %v1016
        %1151 = vst [vmem:[%s1143 + $0x38] sm:$0xff] %v1018
        %1152 = vst [vmem:[%s1143 + $0x80] sm:$0xff] %v891
        %1153 = vst [vmem:[%s1143 + $0x88] sm:$0xff] %v893
        %1154 = vst [vmem:[%s1143 + $0x90] sm:$0xff] %v934
        %1155 = vst [vmem:[%s1143 + $0x98] sm:$0xff] %v936
        %1156 = vst [vmem:[%s1143 + $0xa0] sm:$0xff] %v977
        %1157 = vst [vmem:[%s1143 + $0xa8] sm:$0xff] %v979
        %1158 = vst [vmem:[%s1143 + $0xb0] sm:$0xff] %v1020
        %1159 = vst [vmem:[%s1143 + $0xb8] sm:$0xff] %v1022
        %p1160 = scmp.eq.s32.totalorder %s28, 1
        // Predicated region
        $region49: #{tpu_custom_call.1} parent=31 // pred_check
          %p1161 = pneg %p1160
        $region50: #{tpu_custom_call.1} parent=31 // pred_check_branch
          %1163 = sbr.rel (%p1161) target = $region52
        $region51: #{tpu_custom_call.1} parent=31 // pred_region
          %v1164 = vld [vmem:[#allocation2] sm:$0xff]
          %v1165 = vld [vmem:[#allocation2 + $0x8] sm:$0xff]
          %v1166 = vld [vmem:[#allocation3] sm:$0xff]
          %v1167 = vld [vmem:[#allocation3 + $0x8] sm:$0xff]
          %v1168 = vlog2.pop %v1166
          %v1169 = vmul.f32 %v1168, 0.6931472
          %v1170 = vlog2.pop %v1167
          %v1171 = vmul.f32 %v1170, 0.6931472
          %v1172 = vadd.f32 %v1164, %v1169
          %v1173 = vadd.f32 %v1165, %v1171
          %v1174 = vld [vmem:[%s275] sm:$0xff]
          %v1175 = vld [vmem:[%s275 + $0x8] sm:$0xff]
          %v1176 = vld [vmem:[%s275 + $0x10] sm:$0xff]
          %v1177 = vld [vmem:[%s275 + $0x18] sm:$0xff]
          %v1178 = vld [vmem:[%s275 + $0x20] sm:$0xff]
          %v1179 = vld [vmem:[%s275 + $0x28] sm:$0xff]
          %v1180 = vld [vmem:[%s275 + $0x30] sm:$0xff]
          %v1181 = vld [vmem:[%s275 + $0x38] sm:$0xff]
          %v1182 = vld [vmem:[%s275 + $0x40] sm:$0xff]
          %v1183 = vld [vmem:[%s275 + $0x48] sm:$0xff]
          %v1184 = vld [vmem:[%s275 + $0x50] sm:$0xff]
          %v1185 = vld [vmem:[%s275 + $0x58] sm:$0xff]
          %v1186 = vld [vmem:[%s275 + $0x60] sm:$0xff]
          %v1187 = vld [vmem:[%s275 + $0x68] sm:$0xff]
          %v1188 = vld [vmem:[%s275 + $0x70] sm:$0xff]
          %v1189 = vld [vmem:[%s275 + $0x78] sm:$0xff]
          %v1190 = vld [vmem:[%s275 + $0x80] sm:$0xff]
          %v1191 = vld [vmem:[%s275 + $0x88] sm:$0xff]
          %v1192 = vld [vmem:[%s275 + $0x90] sm:$0xff]
          %v1193 = vld [vmem:[%s275 + $0x98] sm:$0xff]
          %v1194 = vld [vmem:[%s275 + $0xa0] sm:$0xff]
          %v1195 = vld [vmem:[%s275 + $0xa8] sm:$0xff]
          %v1196 = vld [vmem:[%s275 + $0xb0] sm:$0xff]
          %v1197 = vld [vmem:[%s275 + $0xb8] sm:$0xff]
          %v1198 = vld [vmem:[%s275 + $0xc0] sm:$0xff]
          %v1199 = vld [vmem:[%s275 + $0xc8] sm:$0xff]
          %v1200 = vld [vmem:[%s275 + $0xd0] sm:$0xff]
          %v1201 = vld [vmem:[%s275 + $0xd8] sm:$0xff]
          %v1202 = vld [vmem:[%s275 + $0xe0] sm:$0xff]
          %v1203 = vld [vmem:[%s275 + $0xe8] sm:$0xff]
          %v1204 = vld [vmem:[%s275 + $0xf0] sm:$0xff]
          %v1205 = vld [vmem:[%s275 + $0xf8] sm:$0xff]
          %1207 = vset.pattern.permute.xlu0 0
          %1208 = vperm.xlu0 %1207, %v1172
          %v1209 = vpop.permute.xlu0 %1208
          %1212 = vset.pattern.permute.xlu0 0
          %1213 = vperm.xlu0 %1212, %v1173
          %v1214 = vpop.permute.xlu0 %1213
          %v1216 = vsub.f32 %v1174, %v1209
          %v1217 = vsub.f32 %v1175, %v1209
          %v1218 = vsub.f32 %v1176, %v1209
          %v1219 = vsub.f32 %v1177, %v1209
          %v1220 = vsub.f32 %v1178, %v1209
          %v1221 = vsub.f32 %v1179, %v1209
          %v1222 = vsub.f32 %v1180, %v1209
          %v1223 = vsub.f32 %v1181, %v1209
          %v1224 = vsub.f32 %v1182, %v1209
          %v1225 = vsub.f32 %v1183, %v1209
          %v1226 = vsub.f32 %v1184, %v1209
          %v1227 = vsub.f32 %v1185, %v1209
          %v1228 = vsub.f32 %v1186, %v1209
          %v1229 = vsub.f32 %v1187, %v1209
          %v1230 = vsub.f32 %v1188, %v1209
          %v1231 = vsub.f32 %v1189, %v1209
          %v1232 = vsub.f32 %v1190, %v1214
          %v1233 = vsub.f32 %v1191, %v1214
          %v1234 = vsub.f32 %v1192, %v1214
          %v1235 = vsub.f32 %v1193, %v1214
          %v1236 = vsub.f32 %v1194, %v1214
          %v1237 = vsub.f32 %v1195, %v1214
          %v1238 = vsub.f32 %v1196, %v1214
          %v1239 = vsub.f32 %v1197, %v1214
          %v1240 = vsub.f32 %v1198, %v1214
          %v1241 = vsub.f32 %v1199, %v1214
          %v1242 = vsub.f32 %v1200, %v1214
          %v1243 = vsub.f32 %v1201, %v1214
          %v1244 = vsub.f32 %v1202, %v1214
          %v1245 = vsub.f32 %v1203, %v1214
          %v1246 = vsub.f32 %v1204, %v1214
          %v1247 = vsub.f32 %v1205, %v1214
          %1248 = vst [vmem:[%s275] sm:$0xff] %v1216
          %1249 = vst [vmem:[%s275 + $0x8] sm:$0xff] %v1217
          %1250 = vst [vmem:[%s275 + $0x10] sm:$0xff] %v1218
          %1251 = vst [vmem:[%s275 + $0x18] sm:$0xff] %v1219
          %1252 = vst [vmem:[%s275 + $0x20] sm:$0xff] %v1220
          %1253 = vst [vmem:[%s275 + $0x28] sm:$0xff] %v1221
          %1254 = vst [vmem:[%s275 + $0x30] sm:$0xff] %v1222
          %1255 = vst [vmem:[%s275 + $0x38] sm:$0xff] %v1223
          %1256 = vst [vmem:[%s275 + $0x40] sm:$0xff] %v1224
          %1257 = vst [vmem:[%s275 + $0x48] sm:$0xff] %v1225
          %1258 = vst [vmem:[%s275 + $0x50] sm:$0xff] %v1226
          %1259 = vst [vmem:[%s275 + $0x58] sm:$0xff] %v1227
          %1260 = vst [vmem:[%s275 + $0x60] sm:$0xff] %v1228
          %1261 = vst [vmem:[%s275 + $0x68] sm:$0xff] %v1229
          %1262 = vst [vmem:[%s275 + $0x70] sm:$0xff] %v1230
          %1263 = vst [vmem:[%s275 + $0x78] sm:$0xff] %v1231
          %1264 = vst [vmem:[%s275 + $0x80] sm:$0xff] %v1232
          %1265 = vst [vmem:[%s275 + $0x88] sm:$0xff] %v1233
          %1266 = vst [vmem:[%s275 + $0x90] sm:$0xff] %v1234
          %1267 = vst [vmem:[%s275 + $0x98] sm:$0xff] %v1235
          %1268 = vst [vmem:[%s275 + $0xa0] sm:$0xff] %v1236
          %1269 = vst [vmem:[%s275 + $0xa8] sm:$0xff] %v1237
          %1270 = vst [vmem:[%s275 + $0xb0] sm:$0xff] %v1238
          %1271 = vst [vmem:[%s275 + $0xb8] sm:$0xff] %v1239
          %1272 = vst [vmem:[%s275 + $0xc0] sm:$0xff] %v1240
          %1273 = vst [vmem:[%s275 + $0xc8] sm:$0xff] %v1241
          %1274 = vst [vmem:[%s275 + $0xd0] sm:$0xff] %v1242
          %1275 = vst [vmem:[%s275 + $0xd8] sm:$0xff] %v1243
          %1276 = vst [vmem:[%s275 + $0xe0] sm:$0xff] %v1244
          %1277 = vst [vmem:[%s275 + $0xe8] sm:$0xff] %v1245
          %1278 = vst [vmem:[%s275 + $0xf0] sm:$0xff] %v1246
          %1279 = vst [vmem:[%s275 + $0xf8] sm:$0xff] %v1247
        $region52: #{tpu_custom_call.1} parent=31 // pred_fallthru
          _
        %s1280 = sand.u32 %s121, 1
        %s1281 = scalar_lea.sflag [#allocation6], %s1280
        %s1282 = sand.u32 %s121, 1
        %s1283 = smul.addr %s1282, 256
        %s1284 = scalar_lea.vmem [#allocation10], %s1283
        // Predicated region
        $region53: #{tpu_custom_call.1} parent=31 // pred_check
          %p1285 = pneg %p131
        $region54: #{tpu_custom_call.1} parent=31 // pred_check_branch
          %1287 = sbr.rel (%p1285) target = $region56
        $region55: #{tpu_custom_call.1} parent=31 // pred_region
          %s1288 = smul.u32 2, %s27
          %s1290 = ssub.s32 4096, 4096
          %1291 = vsyncadd %s1281, %s1290
          %s1292 = smul.addr %s1288, 16
          %s1293 = smul.addr %s1292, 128
          %s1294 = scalar_lea.hbm %s3, %s1293
          %s1295 = sshll.u32 %s1284, 4
          %s1296 = int_to_ptr.vmem [resolvable:$true] %s1295
          %1301 = dma.vmem_to_hbm [thread:$0]  %s1296, 4096, %s1294, %s1281, 2048, 2048, 128
        $region56: #{tpu_custom_call.1} parent=31 // pred_fallthru
          _
      $region32: #{tpu_custom_call.1} parent=5 // pred_fallthru
        _
      %p1302 = scmp.le.s32.totalorder 2, %s18
      // Predicated region
      $region57: #{tpu_custom_call.1} parent=5 // pred_check
        %p1303 = pneg %p1302
      $region58: #{tpu_custom_call.1} parent=5 // pred_check_branch
        %1305 = sbr.rel (%p1303) target = $region60
      $region59: #{tpu_custom_call.1} parent=5 // pred_region
        %s1306 = ssub.s32 %s18, 2
        // Predicated region
        $region61: #{tpu_custom_call.1} parent=59 // pred_check
          %p1307 = pneg %p137
        $region62: #{tpu_custom_call.1} parent=59 // pred_check_branch
          %1309 = sbr.rel (%p1307) target = $region64
        $region63: #{tpu_custom_call.1} parent=59 // pred_region
          %s1310 = sand.u32 %s122, 1
          %s1311 = scalar_lea.sflag [#allocation6], %s1310
          %s1312 = sand.u32 %s122, 1
          %s1313 = smul.addr %s1312, 256
          %s1314 = scalar_lea.vmem [#allocation10], %s1313
          %1315 = dma.done %s1311, 4096
        $region64: #{tpu_custom_call.1} parent=59 // pred_fallthru
          _
      $region60: #{tpu_custom_call.1} parent=5 // pred_fallthru
        _
    $region6: #{tpu_custom_call.1} parent=1 // loop_footer
      %s22 = sadd.s32 1, %s18
    $region7: #{tpu_custom_call.1} parent=1 // loop_footer_branch
      %17 = sbr.rel target = $region3
    $region8: #{tpu_custom_call.1} parent=1 // loop_exit
      _
    %1316 = vsyncpa [#allocation5], 1
    %s1317 = scalar_lea.sflag [#allocation5], 1
    %1318 = vsyncpa %s1317, 1
    %1319 = vsyncpa [#allocation8], 1
    %s1320 = scalar_lea.sflag [#allocation8], 1
    %1321 = vsyncpa %s1320, 1
    %1322 = vsyncpa [#allocation6], 1
    %s1323 = scalar_lea.sflag [#allocation6], 1
    %1324 = vsyncpa %s1323, 1

</llo_original>
